<compile_context>
chip_gen: v6e
topology: v6e:2x2x1
jax: 0.10.0
libtpu: 0.0.40
codegen_flags: <defaults>
</compile_context>

<pallas_src>
import functools

import jax
import jax.numpy as jnp
from jax import lax
from jax.experimental import pallas as pl
from jax.experimental.pallas import tpu as pltpu

_LN_EPS = 1e-8     # nn.LayerNorm(eps=1e-08) in the PyTorch module
_BN_EPS = 1e-5     # nn.BatchNorm1d default eps
NUM_UNITS = 16
WIDTH = 32
PE_GROUPS = 8


def _round_up(x, m):
    return (x + m - 1) // m * m


# ======================================================================================
# Kernel 1: fused  (X @ W) * scale + shift  ->  {identity | ELU}
#   - output columns zero-padded to a multiple of 128 (lane-dense vst)
#   - rows tiled on a parallel grid axis
# ======================================================================================
def _mm_kernel(x_ref, w_ref, s_ref, b_ref, o_ref, *, act):
    acc = jnp.dot(x_ref[...], w_ref[...], preferred_element_type=jnp.float32)
    y = acc * s_ref[...] + b_ref[...]
    if act == "elu":
        y = jnp.where(y > 0.0, y, jnp.exp(jnp.minimum(y, 0.0)) - 1.0)
    o_ref[...] = y


def mm_scale_act(x, w, scale, shift, act="id"):
    """y[r, n] = act( (x @ w)[r, n] * scale[n] + shift[n] ).  x:(R,K), w:(K,N)."""
    x = x.astype(jnp.float32)
    w = w.astype(jnp.float32)
    R, K = x.shape
    N = w.shape[1]
    n_pad = _round_up(max(N, 128), 128)          # lane-dense output stores

    # Row tiling: single tile at small sizes, 1024-row tiles (parallel axis) when large.
    if R <= 2048:
        tile_r = _round_up(max(R, 8), 8)
    else:
        tile_r = 1024
    r_pad = _round_up(R, tile_r)

    xp = jnp.pad(x, ((0, r_pad - R), (0, 0))) if r_pad != R else x
    wp = jnp.pad(w, ((0, 0), (0, n_pad - N)))
    sp = jnp.pad(scale.astype(jnp.float32).reshape(-1), (0, n_pad - N)).reshape(1, n_pad)
    bp = jnp.pad(shift.astype(jnp.float32).reshape(-1), (0, n_pad - N)).reshape(1, n_pad)

    out = pl.pallas_call(
        functools.partial(_mm_kernel, act=act),
        out_shape=jax.ShapeDtypeStruct((r_pad, n_pad), jnp.float32),
        grid=(r_pad // tile_r,),
        in_specs=[
            pl.BlockSpec((tile_r, K), lambda i: (i, 0)),
            pl.BlockSpec((K, n_pad), lambda i: (0, 0)),
            pl.BlockSpec((1, n_pad), lambda i: (0, 0)),
            pl.BlockSpec((1, n_pad), lambda i: (0, 0)),
        ],
        out_specs=pl.BlockSpec((tile_r, n_pad), lambda i: (i, 0)),
        compiler_params=pltpu.CompilerParams(dimension_semantics=("parallel",)),
    )(xp, wp, sp, bp)
    return out[:R, :N]


# ======================================================================================
# Kernel 2: GRU recurrence (PyTorch gate math, gates packed [r|z|n]).
#   grid axis = independent "groups" (fwd/bwd direction of the intra GRU, or the 8 PE
#   group GRUs); hidden state lives in VMEM scratch; zero initial state (torch default).
#   Weight layout note (checkpoint porting): wi/wh == torch weight_ih_l0.T / weight_hh_l0.T
# ======================================================================================
def _gru_kernel(x_ref, wi_ref, wh_ref, bi_ref, bh_ref, o_ref, h_ref):
    h_ref[...] = jnp.zeros_like(h_ref)
    T = x_ref.shape[0]
    H = h_ref.shape[-1]

    def step(t, carry):
        xt = x_ref[t]                                   # (Bb, H)
        h = h_ref[...]
        gi = jnp.dot(xt, wi_ref[...], preferred_element_type=jnp.float32) + bi_ref[...]
        gh = jnp.dot(h, wh_ref[...], preferred_element_type=jnp.float32) + bh_ref[...]
        r = jax.nn.sigmoid(gi[:, 0:H] + gh[:, 0:H])
        z = jax.nn.sigmoid(gi[:, H:2 * H] + gh[:, H:2 * H])
        n = jnp.tanh(gi[:, 2 * H:3 * H] + r * gh[:, 2 * H:3 * H])
        hn = (1.0 - z) * n + z * h
        h_ref[...] = hn
        o_ref[t] = hn
        return carry

    lax.fori_loop(0, T, step, 0)


def grouped_gru(x_g, wi_g, wh_g, bi_g, bh_g):
    """Run G independent GRUs.  x_g: (G, T, Bb, H) time-major; returns all hidden states."""
    G, T, Bb, H = x_g.shape
    return pl.pallas_call(
        _gru_kernel,
        out_shape=jax.ShapeDtypeStruct((G, T, Bb, H), jnp.float32),
        grid=(G,),
        in_specs=[
            pl.BlockSpec((None, T, Bb, H), lambda g: (g, 0, 0, 0)),
            pl.BlockSpec((None, H, 3 * H), lambda g: (g, 0, 0)),
            pl.BlockSpec((None, H, 3 * H), lambda g: (g, 0, 0)),
            pl.BlockSpec((None, 1, 3 * H), lambda g: (g, 0, 0)),
            pl.BlockSpec((None, 1, 3 * H), lambda g: (g, 0, 0)),
        ],
        out_specs=pl.BlockSpec((None, T, Bb, H), lambda g: (g, 0, 0, 0)),
        scratch_shapes=[pltpu.VMEM((Bb, H), jnp.float32)],
        compiler_params=pltpu.CompilerParams(dimension_semantics=("arbitrary",)),
    )(x_g, wi_g, wh_g, bi_g, bh_g)


# ======================================================================================
# Kernel 3: LayerNorm over the flattened (width=32, numUnits=16) = 512 features
# ======================================================================================
def _ln_kernel(x_ref, g_ref, b_ref, o_ref):
    x = x_ref[...]
    mu = jnp.mean(x, axis=-1, keepdims=True)
    xc = x - mu
    var = jnp.mean(xc * xc, axis=-1, keepdims=True)
    o_ref[...] = xc * lax.rsqrt(var + _LN_EPS) * g_ref[...] + b_ref[...]


def layer_norm(x, gamma, beta):
    R, D = x.shape
    r_pad = _round_up(max(R, 8), 8)
    xp = jnp.pad(x, ((0, r_pad - R), (0, 0))) if r_pad != R else x
    out = pl.pallas_call(
        _ln_kernel,
        out_shape=jax.ShapeDtypeStruct((r_pad, D), jnp.float32),
        grid=(1,),
        in_specs=[
            pl.BlockSpec((r_pad, D), lambda i: (0, 0)),
            pl.BlockSpec((1, D), lambda i: (0, 0)),
            pl.BlockSpec((1, D), lambda i: (0, 0)),
        ],
        out_specs=pl.BlockSpec((r_pad, D), lambda i: (0, 0)),
    )(xp, gamma.reshape(1, D), beta.reshape(1, D))
    return out[:R]


# ======================================================================================
# Kernel 4: complex ratio mask application (final output)
# ======================================================================================
def _crm_kernel(xr_ref, xi_ref, mr_ref, mi_ref, or_ref, oi_ref):
    xr, xi = xr_ref[...], xi_ref[...]
    mr, mi = mr_ref[...], mi_ref[...]
    or_ref[...] = xr * mr - xi * mi
    oi_ref[...] = xr * mi + xi * mr


def apply_crm(x_ref, mask):
    b, f, t, _ = x_ref.shape
    flat = lambda a: a.reshape(b, f * t)
    spec = pl.BlockSpec((b, f * t), lambda i: (0, 0))
    o_r, o_i = pl.pallas_call(
        _crm_kernel,
        out_shape=(jax.ShapeDtypeStruct((b, f * t), jnp.float32),
                   jax.ShapeDtypeStruct((b, f * t), jnp.float32)),
        grid=(1,),
        in_specs=[spec, spec, spec, spec],
        out_specs=(spec, spec),
    )(flat(x_ref[..., 0]), flat(x_ref[..., 1]), flat(mask[..., 0]), flat(mask[..., 1]))
    return jnp.stack([o_r.reshape(b, f, t), o_i.reshape(b, f, t)], axis=-1)


# ======================================================================================
# Conv helpers: im2col (XLA glue) feeding the fused Pallas matmul kernel
# ======================================================================================
def _im2col_1d(x, K, stride):
    # x: (N, C, L) already padded -> (N, L_out, C*K), patch flat index = c*K + k
    N, C, L = x.shape
    L_out = (L - K) // stride + 1
    cols = [x[:, :, k:k + stride * L_out:stride] for k in range(K)]    # K x (N, C, L_out)
    patches = jnp.stack(cols, axis=2)                                   # (N, C, K, L_out)
    return jnp.transpose(patches, (0, 3, 1, 2)).reshape(N, L_out, C * K)


def _bn_fold(bias, bn):
    if bn is None:
        return jnp.ones((bias.shape[0],), jnp.float32), bias
    scale = bn["gamma"] * lax.rsqrt(bn["var"] + _BN_EPS)
    shift = (bias - bn["mean"]) * scale + bn["beta"]
    return scale, shift


def conv1d(x, w, bias, stride, pad, bn=None, act="id"):
    # x: (N, Cin, L); w: (Cout, Cin, K)  -- torch nn.Conv1d weight layout
    N, Cin, _ = x.shape
    Cout, _, K = w.shape
    xp = jnp.pad(x, ((0, 0), (0, 0), (pad, pad)))
    patches = _im2col_1d(xp, K, stride)
    L_out = patches.shape[1]
    wm = jnp.transpose(w, (1, 2, 0)).reshape(Cin * K, Cout)
    scale, shift = _bn_fold(bias, bn)
    y = mm_scale_act(patches.reshape(N * L_out, Cin * K), wm, scale, shift, act)
    return jnp.transpose(y.reshape(N, L_out, Cout), (0, 2, 1))


def conv_transpose1d(x, w, bias, stride, pad, out_pad=0, bn=None, act="id"):
    # w: (Cin, Cout, K) -- torch nn.ConvTranspose1d weight layout.
    # Implemented as zero-dilation + padding (XLA glue) followed by a stride-1
    # correlation done by the fused Pallas matmul kernel.
    N, Cin, L = x.shape
    _, Cout, K = w.shape
    xd = jnp.zeros((N, Cin, (L - 1) * stride + 1), x.dtype).at[:, :, ::stride].set(x)
    lp = K - 1 - pad
    xd = jnp.pad(xd, ((0, 0), (0, 0), (lp, lp + out_pad)))
    w_eq = jnp.transpose(jnp.flip(w, axis=2), (1, 0, 2))                # (Cout, Cin, K)
    patches = _im2col_1d(xd, K, 1)
    L_out = patches.shape[1]
    wm = jnp.transpose(w_eq, (1, 2, 0)).reshape(Cin * K, Cout)
    scale, shift = _bn_fold(bias, bn)
    y = mm_scale_act(patches.reshape(N * L_out, Cin * K), wm, scale, shift, act)
    return jnp.transpose(y.reshape(N, L_out, Cout), (0, 2, 1))


def pointwise_conv(x, w, bias, act="id"):
    # 1x1 Conv1d == channel matmul.  w: (Cout, Cin)  (== torch weight[:, :, 0])
    N, Cin, L = x.shape
    Cout = w.shape[0]
    xr = jnp.transpose(x, (0, 2, 1)).reshape(N * L, Cin)
    y = mm_scale_act(xr, w.T, jnp.ones((Cout,), jnp.float32), bias, act)
    return jnp.transpose(y.reshape(N, L, Cout), (0, 2, 1))


def linear(x2d, w, bias, act="id"):
    # torch nn.Linear: y = x @ w.T + b ;  w: (Cout, Cin)
    return mm_scale_act(x2d, w.T, jnp.ones((w.shape[0],), jnp.float32), bias, act)


# ======================================================================================
# DPRNN_GRU / PE blocks
# ======================================================================================
def pe_forward(x, p):
    # x: (b, t, 32, 16) -> (b, t, 32, 16).   (PE module with groups=8, GRU over time.)
    b, t, f, c = x.shape
    fg = f // PE_GROUPS
    xg = jnp.transpose(x, (0, 2, 1, 3)).reshape(b, PE_GROUPS, fg, t, c)
    xg = jnp.transpose(xg, (1, 3, 0, 2, 4)).reshape(PE_GROUPS, t, b * fg, c)
    hs = grouped_gru(xg, p["gru_wi"], p["gru_wh"], p["gru_bi"], p["gru_bh"])
    hs = hs.reshape(PE_GROUPS, t, b, fg, c)
    x_merge = jnp.transpose(hs, (2, 1, 0, 3, 4)).reshape(b, t, f, c)

    # The 8 per-group Linear(16,16) layers applied as ONE block-diagonal matmul over the
    # flattened (f, c) features (exact; replaces 8 tiny matmuls / a Python loop).
    w_blk = jnp.repeat(jnp.transpose(p["fc_w"], (0, 2, 1)), fg, axis=0)   # (f, c, c)  == W.T per freq
    w_bd = jnp.einsum("jk,jio->jiko", jnp.eye(f, dtype=jnp.float32), w_blk).reshape(f * c, f * c)
    b_bd = jnp.repeat(p["fc_b"], fg, axis=0).reshape(-1)                  # (f*c,)
    fcm = mm_scale_act(x_merge.reshape(b * t, f * c), w_bd,
                       jnp.ones((f * c,), jnp.float32), b_bd, "id")

    ln = layer_norm(fcm, p["ln_gamma"].reshape(-1), p["ln_beta"].reshape(-1))
    return ln.reshape(b, t, f, c)


def dprnn_gru_forward(x, p):
    # x: (b, 16, t, 32) -> (b, 16, t, 32).   (DPRNN_GRU module.)
    b, c, t, f = x.shape
    xp = jnp.transpose(x, (0, 2, 3, 1))                         # (b, t, f, c)
    seq = xp.reshape(b * t, f, c)
    seq_t = jnp.transpose(seq, (1, 0, 2))                       # (f, b*t, c)  time-major over freq
    xg = jnp.stack([seq_t, jnp.flip(seq_t, axis=0)], axis=0)    # forward / backward directions
    hs = grouped_gru(xg, p["intra_wi"], p["intra_wh"], p["intra_bi"], p["intra_bh"])
    rnn = jnp.concatenate([hs[0], jnp.flip(hs[1], axis=0)], axis=-1)      # (f, b*t, 2c)
    rnn = jnp.transpose(rnn, (1, 0, 2)).reshape(b * t * f, 2 * c)
    fc = linear(rnn, p["intra_fc_w"], p["intra_fc_b"])                     # (b*t*f, c)
    intra = layer_norm(fc.reshape(b * t, f * c),
                       p["intra_ln_gamma"].reshape(-1),
                       p["intra_ln_beta"].reshape(-1)).reshape(b, t, f, c)
    intra_out = xp + intra
    inter = pe_forward(intra_out, p["pe"])
    return jnp.transpose(intra + inter, (0, 3, 1, 2))           # (b, c, t, f)


# ======================================================================================
# Full DPCRN_Light forward
# ======================================================================================
def dpcrn_forward(x, p):
    # x: (B, F=257, T, 2)  (real/imag spectrogram, same layout the torch forward expects)
    x_ref = x
    xp = jnp.transpose(x, (0, 2, 1, 3))                          # (B, T, F, C)
    b, t, f, c = xp.shape
    n = b * t
    x_enc = jnp.transpose(xp.reshape(n, f, c), (0, 2, 1))        # (N, 2, 257)

    x1 = conv1d(x_enc, p["conv1_w"], p["conv1_b"], 2, 2, bn=p["bn1"], act="elu")   # (N, 4, 128)
    x2 = conv1d(x1, p["conv2_w"], p["conv2_b"], 2, 3, bn=p["bn2"], act="elu")      # (N, 16, 64)
    x3 = conv1d(x2, p["conv3_w"], p["conv3_b"], 2, 2, bn=p["bn3"], act="elu")      # (N, 32, 32)

    # conv1X1d followed by conv1_fm (both 1x1, no nonlinearity between): fold into one matmul.
    w_comb = p["conv_fm_w"] @ p["conv1x1_w"]
    b_comb = p["conv_fm_w"] @ p["conv1x1_b"] + p["conv_fm_b"]
    x4 = pointwise_conv(x3, w_comb, b_comb)                                        # (N, 16, 32)

    r = jnp.transpose(x4.reshape(b, t, 16, 32), (0, 2, 1, 3))                      # (b, 16, t, 32)
    r = dprnn_gru_forward(r, p["dprnn0"])
    r = dprnn_gru_forward(r, p["dprnn1"])
    r = dprnn_gru_forward(r, p["dprnn2"])
    rr = jnp.transpose(r, (0, 2, 1, 3)).reshape(n, 16, 32)
    rr = pointwise_conv(rr, p["deconv_fm_w"], p["deconv_fm_b"])                    # (N, 32, 32)

    o1 = jnp.concatenate([rr, x3], axis=1)                                         # (N, 64, 32)
    o1 = pointwise_conv(o1, p["de1_pw_w"], p["de1_pw_b"])                          # (N, 32, 32)
    o1 = conv_transpose1d(o1, p["de1_tw"], p["de1_tb"], 2, 2, 0,
                          bn=p["dbn1"], act="elu")                                 # (N, 16, 64)

    o2 = jnp.concatenate([o1, x2], axis=1)                                         # (N, 32, 64)
    o2 = pointwise_conv(o2, p["de2_pw_w"], p["de2_pw_b"])                          # (N, 16, 64)
    o2 = conv_transpose1d(o2, p["de2_tw"], p["de2_tb"], 2, 3, 0,
                          bn=p["dbn2"], act="elu")                                 # (N, 4, 128)

    o3 = jnp.concatenate([o2, x1], axis=1)                                         # (N, 8, 128)
    o3 = pointwise_conv(o3, p["de3_pw_w"], p["de3_pw_b"])                          # (N, 4, 128)
    o3 = conv_transpose1d(o3, p["de3_tw"], p["de3_tb"], 2, 2, 1)                   # (N, 2, 257)

    mask = jnp.transpose(o3.reshape(b, t, c, f), (0, 3, 1, 2))                     # (b, F, t, 2)
    return apply_crm(x_ref, mask)


# ======================================================================================
# Deterministic parameter construction (PyTorch layouts noted inline)
# ======================================================================================
def init_params(key):
    keys = iter(jax.random.split(key, 512))

    def nrm(shape, fan_in):
        return jax.random.normal(next(keys), shape, jnp.float32) / jnp.sqrt(float(fan_in))

    def bn(ch):
        return {"gamma": 1.0 + 0.1 * jax.random.normal(next(keys), (ch,), jnp.float32),
                "beta": 0.1 * jax.random.normal(next(keys), (ch,), jnp.float32),
                "mean": 0.1 * jax.random.normal(next(keys), (ch,), jnp.float32),
                "var": 1.0 + 0.1 * jnp.abs(jax.random.normal(next(keys), (ch,), jnp.float32))}

    def gru(h):   # packed like torch weight_ih_l0.T / weight_hh_l0.T, gate order [r|z|n]
        return {"wi": nrm((h, 3 * h), h), "wh": nrm((h, 3 * h), h),
                "bi": nrm((1, 3 * h), h), "bh": nrm((1, 3 * h), h)}

    def stack_grus(gs):
        return {k: jnp.stack([g[k] for g in gs], axis=0) for k in gs[0]}

    def dprnn():
        h, w_ = NUM_UNITS, WIDTH
        intra = stack_grus([gru(h), gru(h)])                   # fwd / bwd direction
        pe_gru = stack_grus([gru(h) for _ in range(PE_GROUPS)])
        pe = {"gru_wi": pe_gru["wi"], "gru_wh": pe_gru["wh"],
              "gru_bi": pe_gru["bi"], "gru_bh": pe_gru["bh"],
              "fc_w": jnp.stack([nrm((h, h), h) for _ in range(PE_GROUPS)]),   # torch Linear (out,in)
              "fc_b": jnp.stack([nrm((h,), h) for _ in range(PE_GROUPS)]),
              "ln_gamma": 1.0 + 0.1 * jax.random.normal(next(keys), (w_, h), jnp.float32),
              "ln_beta": 0.1 * jax.random.normal(next(keys), (w_, h), jnp.float32)}
        return {"intra_wi": intra["wi"], "intra_wh": intra["wh"],
                "intra_bi": intra["bi"], "intra_bh": intra["bh"],
                "intra_fc_w": nrm((h, 2 * h), 2 * h), "intra_fc_b": nrm((h,), 2 * h),
                "intra_ln_gamma": 1.0 + 0.1 * jax.random.normal(next(keys), (w_, h), jnp.float32),
                "intra_ln_beta": 0.1 * jax.random.normal(next(keys), (w_, h), jnp.float32),
                "pe": pe}

    fs = [4, 16, 32]
    return {
        "conv1_w": nrm((fs[0], 2, 6), 12), "conv1_b": nrm((fs[0],), 12), "bn1": bn(fs[0]),
        "conv2_w": nrm((fs[1], fs[0], 8), fs[0] * 8), "conv2_b": nrm((fs[1],), fs[0] * 8), "bn2": bn(fs[1]),
        "conv3_w": nrm((fs[2], fs[1], 6), fs[1] * 6), "conv3_b": nrm((fs[2],), fs[1] * 6), "bn3": bn(fs[2]),
        "conv1x1_w": nrm((fs[2], fs[2]), fs[2]), "conv1x1_b": nrm((fs[2],), fs[2]),
        "conv_fm_w": nrm((16, fs[2]), fs[2]), "conv_fm_b": nrm((16,), fs[2]),
        "dprnn0": dprnn(), "dprnn1": dprnn(), "dprnn2": dprnn(),
        "deconv_fm_w": nrm((fs[2], 16), 16), "deconv_fm_b": nrm((fs[2],), 16),
        "de1_pw_w": nrm((fs[2], fs[2] * 2), fs[2] * 2), "de1_pw_b": nrm((fs[2],), fs[2] * 2),
        "de1_tw": nrm((fs[2], fs[1], 6), fs[2] * 6), "de1_tb": nrm((fs[1],), fs[2] * 6), "dbn1": bn(fs[1]),
        "de2_pw_w": nrm((fs[1], fs[1] * 2), fs[1] * 2), "de2_pw_b": nrm((fs[1],), fs[1] * 2),
        "de2_tw": nrm((fs[1], fs[0], 8), fs[1] * 8), "de2_tb": nrm((fs[0],), fs[1] * 8), "dbn2": bn(fs[0]),
        "de3_pw_w": nrm((fs[0], fs[0] * 2), fs[0] * 2), "de3_pw_b": nrm((fs[0],), fs[0] * 2),
        "de3_tw": nrm((fs[0], 2, 6), fs[0] * 6), "de3_tb": nrm((2,), fs[0] * 6),
    }


if __name__ == "__main__":
    root = jax.random.PRNGKey(0)
    k_in, k_par, k_t1, k_t2, k_t3, k_t4, k_t5 = jax.random.split(root, 7)

    # ---- component check 1: fused matmul kernel (Pallas plumbing check, loose tol) ----
    xt = jax.random.normal(k_t1, (100, 37), jnp.float32)
    wt = 0.2 * jax.random.normal(k_t2, (37, 20), jnp.float32)
    st = 1.0 + 0.1 * jax.random.normal(k_t3, (20,), jnp.float32)
    bt = 0.1 * jax.random.normal(k_t4, (20,), jnp.float32)
    got = mm_scale_act(xt, wt, st, bt, "elu")
    y = xt @ wt * st + bt
    want = jnp.where(y > 0, y, jnp.exp(jnp.minimum(y, 0.0)) - 1.0)
    assert jnp.allclose(got, want, atol=5e-2, rtol=5e-2), "mm kernel mismatch"

    # ---- component check 2: grouped GRU kernel vs lax.scan reference ----
    G, T, Bb, H = 2, 6, 8, NUM_UNITS
    kk = jax.random.split(k_t5, 5)
    xg = jax.random.normal(kk[0], (G, T, Bb, H), jnp.float32)
    wi = 0.3 * jax.random.normal(kk[1], (G, H, 3 * H), jnp.float32)
    wh = 0.3 * jax.random.normal(kk[2], (G, H, 3 * H), jnp.float32)
    bi = 0.1 * jax.random.normal(kk[3], (G, 1, 3 * H), jnp.float32)
    bh = 0.1 * jax.random.normal(kk[4], (G, 1, 3 * H), jnp.float32)
    got = grouped_gru(xg, wi, wh, bi, bh)

    def gru_ref(xs, wi1, wh1, bi1, bh1):
        def step(h, xt_):
            gi = xt_ @ wi1 + bi1
            gh = h @ wh1 + bh1
            r = jax.nn.sigmoid(gi[:, :H] + gh[:, :H])
            z = jax.nn.sigmoid(gi[:, H:2 * H] + gh[:, H:2 * H])
            nn_ = jnp.tanh(gi[:, 2 * H:] + r * gh[:, 2 * H:])
            hn = (1.0 - z) * nn_ + z * h
            return hn, hn
        _, hs = lax.scan(step, jnp.zeros((Bb, H), jnp.float32), xs)
        return hs

    want = jnp.stack([gru_ref(xg[g], wi[g], wh[g], bi[g], bh[g]) for g in range(G)])
    assert jnp.allclose(got, want, atol=5e-2, rtol=5e-2), "gru kernel mismatch"

    # ---- full DPCRN_Light forward at small shapes: (B=2, F=257 bins, T=4 frames, 2) ----
    B, F_BINS, T_FRAMES = 2, 257, 4
    x = jax.random.normal(k_in, (B, F_BINS, T_FRAMES, 2), jnp.float32)
    params = init_params(k_par)
    out = jax.block_until_ready(jax.jit(dpcrn_forward)(x, params))
    assert out.shape == (B, F_BINS, T_FRAMES, 2), out.shape
    assert bool(jnp.all(jnp.isfinite(out))), "non-finite output"

    print("KERNEL_OK")
</pallas_src>

<mosaic_0001>
module attributes {stable_mosaic.version = 11 : i64} {
  func.func @_mm_kernel(%arg0: i32, %arg1: memref<104x37xf32, #tpu.memory_space<vmem>>, %arg2: memref<37x128xf32, #tpu.memory_space<vmem>>, %arg3: memref<1x128xf32, #tpu.memory_space<vmem>>, %arg4: memref<1x128xf32, #tpu.memory_space<vmem>>, %arg5: memref<104x128xf32, #tpu.memory_space<vmem>>) attributes {dimension_semantics = [#tpu.dimension_semantics<parallel>], iteration_bounds = array<i64: 1>, scalar_prefetch = 0 : i64, scratch_operands = 0 : i64, tpu.core_type = #tpu.core_type<tc>, window_params = [{transform_indices = @transform_0, window_bounds = array<i64: 104, 37>}, {pipeline_mode = #tpu.pipeline_mode<synchronous>, transform_indices = @transform_1, window_bounds = array<i64: 37, 128>}, {pipeline_mode = #tpu.pipeline_mode<synchronous>, transform_indices = @transform_2, window_bounds = array<i64: 1, 128>}, {pipeline_mode = #tpu.pipeline_mode<synchronous>, transform_indices = @transform_3, window_bounds = array<i64: 1, 128>}, {transform_indices = @transform_4, window_bounds = array<i64: 104, 128>}]} {
    %c0 = arith.constant 0 : index
    %c0_0 = arith.constant 0 : index
    %0 = vector.load %arg1[%c0, %c0_0] : memref<104x37xf32, #tpu.memory_space<vmem>>, vector<104x37xf32>
    %c0_1 = arith.constant 0 : index
    %c0_2 = arith.constant 0 : index
    %1 = vector.load %arg2[%c0_1, %c0_2] : memref<37x128xf32, #tpu.memory_space<vmem>>, vector<37x128xf32>
    %cst = arith.constant dense<0.000000e+00> : vector<104x128xf32>
    %2 = tpu.matmul %0, %1, %cst {dimension_numbers = #tpu.dot_dimension_numbers<[1], [0], [0], [1], [0, 0, 1, 1], [], []>} : vector<104x37xf32>, vector<37x128xf32>, vector<104x128xf32> -> vector<104x128xf32>
    %c0_3 = arith.constant 0 : index
    %c0_4 = arith.constant 0 : index
    %3 = vector.load %arg3[%c0_3, %c0_4] : memref<1x128xf32, #tpu.memory_space<vmem>>, vector<1x128xf32>
    %4 = vector.broadcast %3 : vector<1x128xf32> to vector<104x128xf32>
    %5 = arith.mulf %2, %4 : vector<104x128xf32>
    %c0_5 = arith.constant 0 : index
    %c0_6 = arith.constant 0 : index
    %6 = vector.load %arg4[%c0_5, %c0_6] : memref<1x128xf32, #tpu.memory_space<vmem>>, vector<1x128xf32>
    %7 = vector.broadcast %6 : vector<1x128xf32> to vector<104x128xf32>
    %8 = arith.addf %5, %7 : vector<104x128xf32>
    %cst_7 = arith.constant 0.000000e+00 : f32
    %9 = vector.broadcast %cst_7 : f32 to vector<104x128xf32>
    %10 = arith.cmpf ogt, %8, %9 : vector<104x128xf32>
    %cst_8 = arith.constant 0.000000e+00 : f32
    %11 = vector.broadcast %cst_8 : f32 to vector<104x128xf32>
    %12 = arith.minimumf %8, %11 : vector<104x128xf32>
    %13 = math.exp %12 : vector<104x128xf32>
    %cst_9 = arith.constant 1.000000e+00 : f32
    %14 = vector.broadcast %cst_9 : f32 to vector<104x128xf32>
    %15 = arith.subf %13, %14 : vector<104x128xf32>
    %16 = arith.select %10, %8, %15 : vector<104x128xi1>, vector<104x128xf32>
    %c0_10 = arith.constant 0 : index
    %c0_11 = arith.constant 0 : index
    %17 = vector.load %arg5[%c0_10, %c0_11] : memref<104x128xf32, #tpu.memory_space<vmem>>, vector<104x128xf32>
    tpu.vector_store %arg5[%c0_10, %c0_11], %16 {strides = array<i32>} : memref<104x128xf32, #tpu.memory_space<vmem>>, vector<104x128xf32>,
    return
  }
  func.func @transform_0(%arg0: i32) -> (i32, i32) {
    %c0_i32 = arith.constant 0 : i32
    %c0_i32_0 = arith.constant 0 : i32
    return %arg0, %c0_i32 : i32, i32
  }
  func.func @transform_1(%arg0: i32) -> (i32, i32) {
    %c0_i32 = arith.constant 0 : i32
    %c0_i32_0 = arith.constant 0 : i32
    %c0_i32_1 = arith.constant 0 : i32
    return %c0_i32, %c0_i32_0 : i32, i32
  }
  func.func @transform_2(%arg0: i32) -> (i32, i32) {
    %c0_i32 = arith.constant 0 : i32
    %c0_i32_0 = arith.constant 0 : i32
    %c0_i32_1 = arith.constant 0 : i32
    return %c0_i32, %c0_i32_0 : i32, i32
  }
  func.func @transform_3(%arg0: i32) -> (i32, i32) {
    %c0_i32 = arith.constant 0 : i32
    %c0_i32_0 = arith.constant 0 : i32
    %c0_i32_1 = arith.constant 0 : i32
    return %c0_i32, %c0_i32_0 : i32, i32
  }
  func.func @transform_4(%arg0: i32) -> (i32, i32) {
    %c0_i32 = arith.constant 0 : i32
    %c0_i32_0 = arith.constant 0 : i32
    return %arg0, %c0_i32 : i32, i32
  }
}

</mosaic_0001>

<llo_original>
// kernel: tpu_custom_call.1
$region0: #{tpu_custom_call.1}
  #allocation0 [shape = 'u32[]', space=smem, size = 0x4, offset = 0x4, fixed_abs, tag = 'smem constant byte address 0x4 - core index']
  #allocation1 [shape = 'u32[144,128]{1,0:T(1,128)}', space=vmem, size = 0x12000, scoped, tag = 'internal scratch']
  %s0 = inlined_call_operand.vmem [shape: f32[104,37], index: 0, kind: input, shape index: {}]
  %s1 = inlined_call_operand.vmem [shape: f32[37,128], index: 1, kind: input, shape index: {}]
  %s2 = inlined_call_operand.vmem [shape: f32[1,128], index: 2, kind: input, shape index: {}]
  %s3 = inlined_call_operand.vmem [shape: f32[1,128], index: 3, kind: input, shape index: {}]
  %s4 = inlined_call_operand.hbm [shape: f32[104,128], index: 4, kind: output, shape index: {}]
  %s5 = sld [smem:[#allocation0]]
  $region26: #{tpu_custom_call.1} parent=0
    _
  %s7 = ssub.s32 1, %s5
  %s8 = scalar_select 0, %s7, %s5
  $region1: #{tpu_custom_call.1} parent=0
    #allocation2 [shape = 'u8[53248]{0}', space=vmem, size = 0xd000, scoped, tag = 'output window, operand 0, single buffered']
    #allocation3 [shape = 's32[1]{0}', space=sflag, size = 0x4, scoped, tag = 'scoped memory for tpu_custom_call.1']
    %9 = vsyncpa [#allocation3], 0
    // Predicated region
    $region2: #{tpu_custom_call.1} parent=1 // pred_check
      _
    $region3: #{tpu_custom_call.1} parent=1 // pred_check_branch
      %11 = sbr.rel (0) target = $region5
    $region4: #{tpu_custom_call.1} parent=1 // pred_region
      _
    $region5: #{tpu_custom_call.1} parent=1 // pred_fallthru
      _
    // Predicated region
    $region6: #{tpu_custom_call.1} parent=1 // pred_check
      _
    $region7: #{tpu_custom_call.1} parent=1 // pred_check_branch
      %13 = sbr.rel (0) target = $region9
    $region8: #{tpu_custom_call.1} parent=1 // pred_region
      _
    $region9: #{tpu_custom_call.1} parent=1 // pred_fallthru
      _
    // Predicated region
    $region10: #{tpu_custom_call.1} parent=1 // pred_check
      _
    $region11: #{tpu_custom_call.1} parent=1 // pred_check_branch
      %15 = sbr.rel (0) target = $region13
    $region12: #{tpu_custom_call.1} parent=1 // pred_region
      _
    $region13: #{tpu_custom_call.1} parent=1 // pred_fallthru
      _
    // Predicated region
    $region14: #{tpu_custom_call.1} parent=1 // pred_check
      _
    $region15: #{tpu_custom_call.1} parent=1 // pred_check_branch
      %17 = sbr.rel (0) target = $region17
    $region16: #{tpu_custom_call.1} parent=1 // pred_region
      _
    $region17: #{tpu_custom_call.1} parent=1 // pred_fallthru
      _
    %v18 = vld [vmem:[%s0] sm:$0xff]
    %v19 = vld [vmem:[%s0 + $0x8] sm:$0xff]
    %v20 = vld [vmem:[%s0 + $0x10] sm:$0xff]
    %v21 = vld [vmem:[%s0 + $0x18] sm:$0xff]
    %v22 = vld [vmem:[%s0 + $0x20] sm:$0xff]
    %v23 = vld [vmem:[%s0 + $0x28] sm:$0xff]
    %v24 = vld [vmem:[%s0 + $0x30] sm:$0xff]
    %v25 = vld [vmem:[%s0 + $0x38] sm:$0xff]
    %v26 = vld [vmem:[%s0 + $0x40] sm:$0xff]
    %v27 = vld [vmem:[%s0 + $0x48] sm:$0xff]
    %v28 = vld [vmem:[%s0 + $0x50] sm:$0xff]
    %v29 = vld [vmem:[%s0 + $0x58] sm:$0xff]
    %v30 = vld [vmem:[%s0 + $0x60] sm:$0xff]
    %v31 = vld [vmem:[%s1] sm:$0xff]
    %v32 = vld [vmem:[%s1 + $0x8] sm:$0xff]
    %v33 = vld [vmem:[%s1 + $0x10] sm:$0xff]
    %v34 = vld [vmem:[%s1 + $0x18] sm:$0xff]
    %v35 = vld [vmem:[%s1 + $0x20] sm:$0x1f]
    %vm36 = vcmask 302080
    %v38 = vsel %vm36, %v18, 0
    %v41 = vsel %vm36, %v19, 0
    %v44 = vsel %vm36, %v20, 0
    %v47 = vsel %vm36, %v21, 0
    %v50 = vsel %vm36, %v22, 0
    %v53 = vsel %vm36, %v23, 0
    %v56 = vsel %vm36, %v24, 0
    %v59 = vsel %vm36, %v25, 0
    %v62 = vsel %vm36, %v26, 0
    %v65 = vsel %vm36, %v27, 0
    %v68 = vsel %vm36, %v28, 0
    %v71 = vsel %vm36, %v29, 0
    %v74 = vsel %vm36, %v30, 0
    %vm76 = vcmask 1044480
    %v78 = vsel %vm76, %v35, 0
    %80 = vmatprep.subr.mxu0 0.0
    %81 = vmatpush1.msra.mxu0 0.0
    %82 = vmatprep.subr.mxu0 0.0
    %83 = vmatpush1.msra.mxu0 0.0
    %84 = vmatprep.subr.mxu0 0.0
    %85 = vmatpush1.msra.mxu0 0.0
    %86 = vmatprep.subr.mxu0 0.0
    %87 = vmatpush1.msra.mxu0 0.0
    %88 = vmatprep.subr.mxu0 0.0
    %89 = vmatpush1.msra.mxu0 0.0
    %90 = vmatprep.subr.mxu0 0.0
    %91 = vmatpush1.msra.mxu0 0.0
    %92 = vmatprep.subr.mxu0 0.0
    %93 = vmatpush1.msra.mxu0 0.0
    %94 = vmatprep.subr.mxu0 0.0
    %95 = vmatpush1.msra.mxu0 0.0
    %96 = vmatprep.subr.mxu0 0.0
    %97 = vmatpush1.msra.mxu0 0.0
    %98 = vmatprep.subr.mxu0 0.0
    %99 = vmatpush1.msra.mxu0 0.0
    %100 = vmatprep.subr.mxu0 0.0
    %101 = vmatpush1.msra.mxu0 0.0
    %102 = vmatprep.subr.mxu0 0.0
    %103 = vmatpush1.msra.mxu0 %v78
    %104 = vmatprep.subr.mxu0 0.0
    %105 = vmatpush1.msra.mxu0 %v34
    %106 = vmatprep.subr.mxu0 0.0
    %107 = vmatpush1.msra.mxu0 %v33
    %108 = vmatprep.subr.mxu0 0.0
    %109 = vmatpush1.msra.mxu0 %v32
    %110 = vmatprep.subr.mxu0 0.0
    %111 = vmatpush1.msra.mxu0 %v31
    %112 = vmatprep.subr.mxu0 0.0
    %113 = vmatpush2.msra.mxu0 0.0
    %114 = vmatprep.subr.mxu0 0.0
    %115 = vmatpush2.msra.mxu0 0.0
    %116 = vmatprep.subr.mxu0 0.0
    %117 = vmatpush2.msra.mxu0 0.0
    %118 = vmatprep.subr.mxu0 0.0
    %119 = vmatpush2.msra.mxu0 0.0
    %120 = vmatprep.subr.mxu0 0.0
    %121 = vmatpush2.msra.mxu0 0.0
    %122 = vmatprep.subr.mxu0 0.0
    %123 = vmatpush2.msra.mxu0 0.0
    %124 = vmatprep.subr.mxu0 0.0
    %125 = vmatpush2.msra.mxu0 0.0
    %126 = vmatprep.subr.mxu0 0.0
    %127 = vmatpush2.msra.mxu0 0.0
    %128 = vmatprep.subr.mxu0 0.0
    %129 = vmatpush2.msra.mxu0 0.0
    %130 = vmatprep.subr.mxu0 0.0
    %131 = vmatpush2.msra.mxu0 0.0
    %132 = vmatprep.subr.mxu0 0.0
    %133 = vmatpush2.msra.mxu0 0.0
    %134 = vmatprep.subr.mxu0 0.0
    %135 = vmatpush2.msra.mxu0 0.0
    %136 = vmatprep.subr.mxu0 0.0
    %137 = vmatpush2.msra.mxu0 0.0
    %138 = vmatprep.subr.mxu0 0.0
    %139 = vmatpush2.msra.mxu0 0.0
    %140 = vmatprep.subr.mxu0 0.0
    %141 = vmatpush2.msra.mxu0 0.0
    %142 = vmatprep.subr.mxu0 0.0
    %143 = vmatpush2.msra.mxu0 0.0
    %144 = vmatprep.mubr.f32.mxu0 0.0
    %145 = vmatmul.mubr.f32.gmra.mxu0 %v38
    %v146 = vpop.f32.mrf.mxu0
    %v147 = vadd.f32 0.0, %v146
    %v148 = vpop.f32.mrf.mxu0
    %149 = vmatprep.mubr.f32.mxu0 0.0
    %150 = vmatmul.mubr.f32.gmra.mxu0 %v41
    %v151 = vpop.f32.mrf.mxu0
    %v152 = vadd.f32 0.0, %v151
    %v153 = vpop.f32.mrf.mxu0
    %154 = vmatprep.mubr.f32.mxu0 0.0
    %155 = vmatmul.mubr.f32.gmra.mxu0 %v44
    %v156 = vpop.f32.mrf.mxu0
    %v157 = vadd.f32 0.0, %v156
    %v158 = vpop.f32.mrf.mxu0
    %159 = vmatprep.mubr.f32.mxu0 0.0
    %160 = vmatmul.mubr.f32.gmra.mxu0 %v47
    %v161 = vpop.f32.mrf.mxu0
    %v162 = vadd.f32 0.0, %v161
    %v163 = vpop.f32.mrf.mxu0
    %164 = vmatprep.mubr.f32.mxu0 0.0
    %165 = vmatmul.mubr.f32.gmra.mxu0 %v50
    %v166 = vpop.f32.mrf.mxu0
    %v167 = vadd.f32 0.0, %v166
    %v168 = vpop.f32.mrf.mxu0
    %169 = vmatprep.mubr.f32.mxu0 0.0
    %170 = vmatmul.mubr.f32.gmra.mxu0 %v53
    %v171 = vpop.f32.mrf.mxu0
    %v172 = vadd.f32 0.0, %v171
    %v173 = vpop.f32.mrf.mxu0
    %174 = vmatprep.mubr.f32.mxu0 0.0
    %175 = vmatmul.mubr.f32.gmra.mxu0 %v56
    %v176 = vpop.f32.mrf.mxu0
    %v177 = vadd.f32 0.0, %v176
    %v178 = vpop.f32.mrf.mxu0
    %179 = vmatprep.mubr.f32.mxu0 0.0
    %180 = vmatmul.mubr.f32.gmra.mxu0 %v59
    %v181 = vpop.f32.mrf.mxu0
    %v182 = vadd.f32 0.0, %v181
    %v183 = vpop.f32.mrf.mxu0
    %184 = vmatprep.mubr.f32.mxu0 0.0
    %185 = vmatmul.mubr.f32.gmra.mxu0 %v62
    %v186 = vpop.f32.mrf.mxu0
    %v187 = vadd.f32 0.0, %v186
    %v188 = vpop.f32.mrf.mxu0
    %189 = vmatprep.mubr.f32.mxu0 0.0
    %190 = vmatmul.mubr.f32.gmra.mxu0 %v65
    %v191 = vpop.f32.mrf.mxu0
    %v192 = vadd.f32 0.0, %v191
    %v193 = vpop.f32.mrf.mxu0
    %194 = vmatprep.mubr.f32.mxu0 0.0
    %195 = vmatmul.mubr.f32.gmra.mxu0 %v68
    %v196 = vpop.f32.mrf.mxu0
    %v197 = vadd.f32 0.0, %v196
    %v198 = vpop.f32.mrf.mxu0
    %199 = vmatprep.mubr.f32.mxu0 0.0
    %200 = vmatmul.mubr.f32.gmra.mxu0 %v71
    %v201 = vpop.f32.mrf.mxu0
    %v202 = vadd.f32 0.0, %v201
    %v203 = vpop.f32.mrf.mxu0
    %204 = vmatprep.mubr.f32.mxu0 0.0
    %205 = vmatmul.mubr.f32.gmra.mxu0 %v74
    %v206 = vpop.f32.mrf.mxu0
    %v207 = vadd.f32 0.0, %v206
    %v208 = vpop.f32.mrf.mxu0
    %209 = vdwg.mxu0
    %v210 = vld [vmem:[%s2] sm:$0x1]
    %v212 = vlaneseq
    %v213 = vshrl.u32 %v212, 7
    %v214 = vsub.s32 0, %v213
    %v215 = vrot.slane %v210, %v214
    %v217 = vmul.f32 %v147, %v215
    %v218 = vmul.f32 %v152, %v215
    %v219 = vmul.f32 %v157, %v215
    %v220 = vmul.f32 %v162, %v215
    %v221 = vmul.f32 %v167, %v215
    %v222 = vmul.f32 %v172, %v215
    %v223 = vmul.f32 %v177, %v215
    %v224 = vmul.f32 %v182, %v215
    %v225 = vmul.f32 %v187, %v215
    %v226 = vmul.f32 %v192, %v215
    %v227 = vmul.f32 %v197, %v215
    %v228 = vmul.f32 %v202, %v215
    %v229 = vmul.f32 %v207, %v215
    %v230 = vld [vmem:[%s3] sm:$0x1]
    %v232 = vlaneseq
    %v233 = vshrl.u32 %v232, 7
    %v234 = vsub.s32 0, %v233
    %v235 = vrot.slane %v230, %v234
    %v237 = vadd.f32 %v217, %v235
    %v238 = vadd.f32 %v218, %v235
    %v239 = vadd.f32 %v219, %v235
    %v240 = vadd.f32 %v220, %v235
    %v241 = vadd.f32 %v221, %v235
    %v242 = vadd.f32 %v222, %v235
    %v243 = vadd.f32 %v223, %v235
    %v244 = vadd.f32 %v224, %v235
    %v245 = vadd.f32 %v225, %v235
    %v246 = vadd.f32 %v226, %v235
    %v247 = vadd.f32 %v227, %v235
    %v248 = vadd.f32 %v228, %v235
    %v249 = vadd.f32 %v229, %v235
    %vm250 = vcmp.gt.f32.partialorder %v237, 0.0
    %vm251 = vcmp.gt.f32.partialorder %v238, 0.0
    %vm252 = vcmp.gt.f32.partialorder %v239, 0.0
    %vm253 = vcmp.gt.f32.partialorder %v240, 0.0
    %vm254 = vcmp.gt.f32.partialorder %v241, 0.0
    %vm255 = vcmp.gt.f32.partialorder %v242, 0.0
    %vm256 = vcmp.gt.f32.partialorder %v243, 0.0
    %vm257 = vcmp.gt.f32.partialorder %v244, 0.0
    %vm258 = vcmp.gt.f32.partialorder %v245, 0.0
    %vm259 = vcmp.gt.f32.partialorder %v246, 0.0
    %vm260 = vcmp.gt.f32.partialorder %v247, 0.0
    %vm261 = vcmp.gt.f32.partialorder %v248, 0.0
    %vm262 = vcmp.gt.f32.partialorder %v249, 0.0
    %v263 = vmin.f32 %v237, 0.0
    %v264 = vmin.f32 %v238, 0.0
    %v265 = vmin.f32 %v239, 0.0
    %v266 = vmin.f32 %v240, 0.0
    %v267 = vmin.f32 %v241, 0.0
    %v268 = vmin.f32 %v242, 0.0
    %v269 = vmin.f32 %v243, 0.0
    %v270 = vmin.f32 %v244, 0.0
    %v271 = vmin.f32 %v245, 0.0
    %v272 = vmin.f32 %v246, 0.0
    %v273 = vmin.f32 %v247, 0.0
    %v274 = vmin.f32 %v248, 0.0
    %v275 = vmin.f32 %v249, 0.0
    %v276 = vmul.f32 %v263, 1.442695
    %v277 = vpow.pop %v276
    %v278 = vmul.f32 %v264, 1.442695
    %v279 = vpow.pop %v278
    %v280 = vmul.f32 %v265, 1.442695
    %v281 = vpow.pop %v280
    %v282 = vmul.f32 %v266, 1.442695
    %v283 = vpow.pop %v282
    %v284 = vmul.f32 %v267, 1.442695
    %v285 = vpow.pop %v284
    %v286 = vmul.f32 %v268, 1.442695
    %v287 = vpow.pop %v286
    %v288 = vmul.f32 %v269, 1.442695
    %v289 = vpow.pop %v288
    %v290 = vmul.f32 %v270, 1.442695
    %v291 = vpow.pop %v290
    %v292 = vmul.f32 %v271, 1.442695
    %v293 = vpow.pop %v292
    %v294 = vmul.f32 %v272, 1.442695
    %v295 = vpow.pop %v294
    %v296 = vmul.f32 %v273, 1.442695
    %v297 = vpow.pop %v296
    %v298 = vmul.f32 %v274, 1.442695
    %v299 = vpow.pop %v298
    %v300 = vmul.f32 %v275, 1.442695
    %v301 = vpow.pop %v300
    %v302 = vsub.f32 %v277, 1.0
    %v303 = vsub.f32 %v279, 1.0
    %v304 = vsub.f32 %v281, 1.0
    %v305 = vsub.f32 %v283, 1.0
    %v306 = vsub.f32 %v285, 1.0
    %v307 = vsub.f32 %v287, 1.0
    %v308 = vsub.f32 %v289, 1.0
    %v309 = vsub.f32 %v291, 1.0
    %v310 = vsub.f32 %v293, 1.0
    %v311 = vsub.f32 %v295, 1.0
    %v312 = vsub.f32 %v297, 1.0
    %v313 = vsub.f32 %v299, 1.0
    %v314 = vsub.f32 %v301, 1.0
    %v315 = vsel %vm250, %v237, %v302
    %v316 = vsel %vm251, %v238, %v303
    %v317 = vsel %vm252, %v239, %v304
    %v318 = vsel %vm253, %v240, %v305
    %v319 = vsel %vm254, %v241, %v306
    %v320 = vsel %vm255, %v242, %v307
    %v321 = vsel %vm256, %v243, %v308
    %v322 = vsel %vm257, %v244, %v309
    %v323 = vsel %vm258, %v245, %v310
    %v324 = vsel %vm259, %v246, %v311
    %v325 = vsel %vm260, %v247, %v312
    %v326 = vsel %vm261, %v248, %v313
    %v327 = vsel %vm262, %v249, %v314
    %328 = vst [vmem:[#allocation2] sm:$0xff] %v315
    %329 = vst [vmem:[#allocation2 + $0x8] sm:$0xff] %v316
    %330 = vst [vmem:[#allocation2 + $0x10] sm:$0xff] %v317
    %331 = vst [vmem:[#allocation2 + $0x18] sm:$0xff] %v318
    %332 = vst [vmem:[#allocation2 + $0x20] sm:$0xff] %v319
    %333 = vst [vmem:[#allocation2 + $0x28] sm:$0xff] %v320
    %334 = vst [vmem:[#allocation2 + $0x30] sm:$0xff] %v321
    %335 = vst [vmem:[#allocation2 + $0x38] sm:$0xff] %v322
    %336 = vst [vmem:[#allocation2 + $0x40] sm:$0xff] %v323
    %337 = vst [vmem:[#allocation2 + $0x48] sm:$0xff] %v324
    %338 = vst [vmem:[#allocation2 + $0x50] sm:$0xff] %v325
    %339 = vst [vmem:[#allocation2 + $0x58] sm:$0xff] %v326
    %340 = vst [vmem:[#allocation2 + $0x60] sm:$0xff] %v327
    // Predicated region
    $region18: #{tpu_custom_call.1} parent=1 // pred_check
      _
    $region19: #{tpu_custom_call.1} parent=1 // pred_check_branch
      %342 = sbr.rel (0) target = $region21
    $region20: #{tpu_custom_call.1} parent=1 // pred_region
      %s344 = ssub.s32 1664, 1664
      %345 = vsyncadd [#allocation3], %s344
      %s346 = sshll.u32 [#allocation2], 4
      %s347 = int_to_ptr.vmem [resolvable:$true] %s346
      %352 = dma.vmem_to_hbm [thread:$0]  %s347, 1664, %s4, [#allocation3], 128, 128, 8
    $region21: #{tpu_custom_call.1} parent=1 // pred_fallthru
      _
    // Predicated region
    $region22: #{tpu_custom_call.1} parent=1 // pred_check
      _
    $region23: #{tpu_custom_call.1} parent=1 // pred_check_branch
      %354 = sbr.rel (0) target = $region25
    $region24: #{tpu_custom_call.1} parent=1 // pred_region
      %355 = dma.done [#allocation3], 1664
    $region25: #{tpu_custom_call.1} parent=1 // pred_fallthru
      _
    %356 = vsyncpa [#allocation3], 1

</llo_original>
